<compile_context>
chip_gen: v5e
topology: v5e:2x2
jax: 0.10.0
libtpu: 0.0.40
codegen_flags: <defaults>
</compile_context>

<pallas_src>
import jax
import jax.numpy as jnp
from jax.experimental import pallas as pl
from jax.experimental.pallas import tpu as pltpu


def _linear_seq_attn_pool_kernel(x_ref, w_ref, mb_ref, o_ref):
    # x_ref:  (Bt, L, H)  native dtype (bf16/f32)
    # w_ref:  (1, 1, H)   native dtype          -- nn.Linear(H, 1) weight row
    # mb_ref: (Bt, 1, L)  f32                   -- bias + (-1e30) * padding_mask
    # o_ref:  (Bt, H)
    bt, l, h = x_ref.shape
    x = x_ref[...]                                            # (Bt, L, H)
    w = jnp.broadcast_to(w_ref[...], (bt, 1, h))              # hoisted once per block

    # scores: (Bt, 1, L) f32 via MXU contraction over H.
    s = jnp.einsum("bqh,blh->bql", w, x,
                   preferred_element_type=jnp.float32)
    s = s + mb_ref[...]                                       # + bias, -1e30 on padding

    # Unnormalized softmax numerator over the (lane-dense) sequence axis.
    m = jnp.max(s, axis=-1, keepdims=True)                    # (Bt, 1, 1)
    e = jnp.exp(s - m)                                        # (Bt, 1, L)
    denom = jnp.sum(e, axis=-1, keepdims=True)                # (Bt, 1, 1)

    # pooled: (Bt, 1, H) f32 via MXU contraction over L.
    p = jnp.einsum("bql,blh->bqh", e.astype(x.dtype), x,
                   preferred_element_type=jnp.float32)

    # Normalize after pooling: touches only the small (Bt, 1, H) tile.
    p = p * pl.reciprocal(denom, approx=False)
    o_ref[...] = p.reshape(bt, h).astype(o_ref.dtype)


def linear_seq_attn_pooling(x, weight, bias, x_mask=None, *, block_b=None):
    """x: (B, L, H); weight: (1, H) or (H,); bias: (1,) or scalar;
    x_mask: (B, L) with 1 = padding (optional).  Returns (B, H)."""
    B, L, H = x.shape
    w3 = jnp.asarray(weight).astype(x.dtype).reshape(1, 1, H)
    bias_f32 = jnp.asarray(bias, jnp.float32).reshape(())

    # Additive score bias: Linear bias everywhere, -1e30 on padding positions.
    if x_mask is None:
        mask_bias = jnp.full((B, 1, L), bias_f32, jnp.float32)
    else:
        mask_bias = (bias_f32 + jnp.where(x_mask.astype(bool),
                                          jnp.float32(-1e30),
                                          jnp.float32(0.0)))
        mask_bias = mask_bias.astype(jnp.float32).reshape(B, 1, L)

    itemsize = jnp.dtype(x.dtype).itemsize
    row_bytes = max(1, L * H * itemsize)

    # Generation-aware sizing (VMEM capacity drives slab size / scoped limit).
    try:
        info = pltpu.get_tpu_info()
        vmem_cap = int(getattr(info, "vmem_capacity_bytes", 128 * 1024 * 1024))
    except Exception:
        vmem_cap = 128 * 1024 * 1024
    small_vmem = vmem_cap <= 64 * 1024 * 1024            # v7x-class TensorCore
    slab_target = (8 if small_vmem else 12) * 1024 * 1024
    vmem_budget = (48 if small_vmem else 100) * 1024 * 1024

    if block_b is None:
        bb = max(1, slab_target // row_bytes)
    else:
        bb = int(block_b)
    bb = int(min(bb, B))
    if B >= 16 and 8 * row_bytes <= 3 * slab_target:
        bb = min(bb, B // 2)             # >= 2 grid steps: keep both v7x TCs busy
        bb = max(8, (bb // 8) * 8)       # sublane-aligned (bb, H) output blocks
    elif B < 16:
        bb = B                           # single block; block dims == array dims
    # TODO(synk): for very long sequences (multi-MiB rows) tile L with an online
    # softmax instead of holding the whole (bb, L, H) slab in VMEM.

    grid = (pl.cdiv(B, bb),)

    # Scoped-VMEM budget from the blocks actually chosen (double-buffered inputs
    # and outputs, sublane-padded (..,1,L)/(..,1,H) tiles, value copies).
    x_blk = bb * L * H * itemsize
    mb_blk = bb * 8 * L * 4
    out_blk = ((bb + 7) // 8) * 8 * H * itemsize
    w_blk = 8 * H * itemsize
    temps = 2 * x_blk + 6 * bb * 8 * L * 4 + 4 * bb * 8 * H * 4
    est = 2 * (x_blk + mb_blk + out_blk) + w_blk + temps
    vmem_limit = int(min(vmem_budget, max(int(1.3 * est), 32 * 1024 * 1024)))

    return pl.pallas_call(
        _linear_seq_attn_pool_kernel,
        out_shape=jax.ShapeDtypeStruct((B, H), x.dtype),
        grid_spec=pltpu.PrefetchScalarGridSpec(
            num_scalar_prefetch=0,
            grid=grid,
            in_specs=[
                pl.BlockSpec((bb, L, H), lambda b: (b, 0, 0)),   # x slab
                pl.BlockSpec((1, 1, H), lambda b: (0, 0, 0)),    # weight row
                pl.BlockSpec((bb, 1, L), lambda b: (b, 0, 0)),   # bias + mask
            ],
            out_specs=pl.BlockSpec((bb, H), lambda b: (b, 0)),   # pooled output
        ),
        compiler_params=pltpu.CompilerParams(
            dimension_semantics=("parallel",),
            vmem_limit_bytes=vmem_limit,
        ),
    )(x, w3, mask_bias)


def linear_seq_attn_pooling_ref(x, weight, bias, x_mask=None):
    """Plain-JAX reference mirroring the PyTorch forward."""
    w = weight.reshape(-1)                               # (H,)
    scores = jnp.einsum("blh,h->bl", x, w) + jnp.asarray(bias).reshape(())
    if x_mask is not None:
        scores = jnp.where(x_mask.astype(bool), -jnp.inf, scores)
    alpha = jax.nn.softmax(scores, axis=-1)
    return jnp.einsum("bl,blh->bh", alpha, x)


if __name__ == "__main__":
    key = jax.random.PRNGKey(0)
    k1, k2, k3 = jax.random.split(key, 3)

    B, L, H = 2, 8, 32
    x = jax.random.normal(k1, (B, L, H), dtype=jnp.float32)

    # Deterministic nn.Linear(H, 1) parameters (synthetic, not a checkpoint load).
    bound = 1.0 / (H ** 0.5)
    weight = jax.random.uniform(k2, (1, H), jnp.float32, -bound, bound)
    bias = jax.random.uniform(k3, (1,), jnp.float32, -bound, bound)

    # x_mask: 1 = padding, 0 = real token; last 2 positions padded
    # (never a fully-masked row, matching the PyTorch module's assumptions).
    x_mask = jnp.zeros((B, L), jnp.int32).at[:, L - 2:].set(1)

    out = jax.block_until_ready(linear_seq_attn_pooling(x, weight, bias, x_mask))
    ref = linear_seq_attn_pooling_ref(x, weight, bias, x_mask)
    assert out.shape == (B, H)
    assert jnp.allclose(out, ref, atol=1e-4, rtol=1e-4), (
        f"max abs diff {jnp.max(jnp.abs(out - ref))}")

    # Second config exercises the multi-step batch grid (>=2 blocks, 8-aligned
    # output tiles, both v7x TensorCores).
    B2 = 16
    x2 = jax.random.normal(k1, (B2, L, H), dtype=jnp.float32)
    mask2 = jnp.zeros((B2, L), jnp.int32).at[:, L - 3:].set(1)
    out2 = jax.block_until_ready(linear_seq_attn_pooling(x2, weight, bias, mask2))
    ref2 = linear_seq_attn_pooling_ref(x2, weight, bias, mask2)
    assert out2.shape == (B2, H)
    assert jnp.allclose(out2, ref2, atol=1e-4, rtol=1e-4), (
        f"max abs diff {jnp.max(jnp.abs(out2 - ref2))}")

    print("KERNEL_OK")
</pallas_src>

<mosaic_0001>
module attributes {stable_mosaic.version = 11 : i64} {
  func.func @_linear_seq_attn_pool_kernel(%arg0: i32, %arg1: memref<2x8x32xf32, #tpu.memory_space<vmem>>, %arg2: memref<1x1x32xf32, #tpu.memory_space<vmem>>, %arg3: memref<2x1x8xf32, #tpu.memory_space<vmem>>, %arg4: memref<2x32xf32, #tpu.memory_space<vmem>>) attributes {dimension_semantics = [#tpu.dimension_semantics<parallel>], iteration_bounds = array<i64: 1>, scalar_prefetch = 0 : i64, scratch_operands = 0 : i64, tpu.core_type = #tpu.core_type<tc>, window_params = [{transform_indices = @transform_0, window_bounds = array<i64: 2, 8, 32>}, {pipeline_mode = #tpu.pipeline_mode<synchronous>, transform_indices = @transform_1, window_bounds = array<i64: 1, 1, 32>}, {transform_indices = @transform_2, window_bounds = array<i64: 2, 1, 8>}, {transform_indices = @transform_3, window_bounds = array<i64: 2, 32>}]} {
    %c0 = arith.constant 0 : index
    %c0_0 = arith.constant 0 : index
    %c0_1 = arith.constant 0 : index
    %0 = vector.load %arg1[%c0, %c0_0, %c0_1] : memref<2x8x32xf32, #tpu.memory_space<vmem>>, vector<2x8x32xf32>
    %c0_2 = arith.constant 0 : index
    %c0_3 = arith.constant 0 : index
    %c0_4 = arith.constant 0 : index
    %1 = vector.load %arg2[%c0_2, %c0_3, %c0_4] : memref<1x1x32xf32, #tpu.memory_space<vmem>>, vector<1x1x32xf32>
    %2 = vector.shape_cast %1 : vector<1x1x32xf32> to vector<1x1x32xf32>
    %3 = vector.broadcast %2 : vector<1x1x32xf32> to vector<2x1x32xf32>
    "tpu.trace_start"() <{level = 10 : i32, message = "bqh,blh->bql"}> : () -> ()
    %cst = arith.constant dense<0.000000e+00> : vector<2x1x8xf32>
    %4 = tpu.matmul %3, %0, %cst {dimension_numbers = #tpu.dot_dimension_numbers<[2], [2], [1], [1], [0, 0, 0, 1, 1, 1], [0], [0]>} : vector<2x1x32xf32>, vector<2x8x32xf32>, vector<2x1x8xf32> -> vector<2x1x8xf32>
    "tpu.trace_stop"() : () -> ()
    %c0_5 = arith.constant 0 : index
    %c0_6 = arith.constant 0 : index
    %c0_7 = arith.constant 0 : index
    %5 = vector.load %arg3[%c0_5, %c0_6, %c0_7] : memref<2x1x8xf32, #tpu.memory_space<vmem>>, vector<2x1x8xf32>
    %6 = arith.addf %4, %5 : vector<2x1x8xf32>
    %cst_8 = arith.constant dense<0xFF800000> : vector<2x1xf32>
    %7 = vector.multi_reduction <maximumf>, %6, %cst_8 [2] : vector<2x1x8xf32> to vector<2x1xf32>
    %8 = vector.shape_cast %7 : vector<2x1xf32> to vector<2x1x1xf32>
    %9 = vector.broadcast %8 : vector<2x1x1xf32> to vector<2x1x8xf32>
    %10 = arith.subf %6, %9 : vector<2x1x8xf32>
    %11 = math.exp %10 : vector<2x1x8xf32>
    %cst_9 = arith.constant dense<0.000000e+00> : vector<2x1xf32>
    %12 = vector.multi_reduction <add>, %11, %cst_9 [2] : vector<2x1x8xf32> to vector<2x1xf32>
    %13 = vector.shape_cast %12 : vector<2x1xf32> to vector<2x1x1xf32>
    "tpu.trace_start"() <{level = 10 : i32, message = "bql,blh->bqh"}> : () -> ()
    %cst_10 = arith.constant dense<0.000000e+00> : vector<2x1x32xf32>
    %14 = tpu.matmul %11, %0, %cst_10 {dimension_numbers = #tpu.dot_dimension_numbers<[2], [1], [1], [2], [0, 0, 0, 1, 1, 2], [0], [0]>} : vector<2x1x8xf32>, vector<2x8x32xf32>, vector<2x1x32xf32> -> vector<2x1x32xf32>
    "tpu.trace_stop"() : () -> ()
    %15 = tpu.reciprocal %13 : vector<2x1x1xf32> -> vector<2x1x1xf32>
    %16 = vector.broadcast %15 : vector<2x1x1xf32> to vector<2x1x32xf32>
    %17 = arith.mulf %14, %16 : vector<2x1x32xf32>
    %18 = vector.shape_cast %17 : vector<2x1x32xf32> to vector<2x32xf32>
    %c0_11 = arith.constant 0 : index
    %c0_12 = arith.constant 0 : index
    %19 = vector.load %arg4[%c0_11, %c0_12] : memref<2x32xf32, #tpu.memory_space<vmem>>, vector<2x32xf32>
    tpu.vector_store %arg4[%c0_11, %c0_12], %18 {strides = array<i32>} : memref<2x32xf32, #tpu.memory_space<vmem>>, vector<2x32xf32>,
    return
  }
  func.func @transform_0(%arg0: i32) -> (i32, i32, i32) {
    %c0_i32 = arith.constant 0 : i32
    %c0_i32_0 = arith.constant 0 : i32
    %c0_i32_1 = arith.constant 0 : i32
    return %arg0, %c0_i32, %c0_i32_0 : i32, i32, i32
  }
  func.func @transform_1(%arg0: i32) -> (i32, i32, i32) {
    %c0_i32 = arith.constant 0 : i32
    %c0_i32_0 = arith.constant 0 : i32
    %c0_i32_1 = arith.constant 0 : i32
    %c0_i32_2 = arith.constant 0 : i32
    return %c0_i32, %c0_i32_0, %c0_i32_1 : i32, i32, i32
  }
  func.func @transform_2(%arg0: i32) -> (i32, i32, i32) {
    %c0_i32 = arith.constant 0 : i32
    %c0_i32_0 = arith.constant 0 : i32
    %c0_i32_1 = arith.constant 0 : i32
    return %arg0, %c0_i32, %c0_i32_0 : i32, i32, i32
  }
  func.func @transform_3(%arg0: i32) -> (i32, i32) {
    %c0_i32 = arith.constant 0 : i32
    %c0_i32_0 = arith.constant 0 : i32
    return %arg0, %c0_i32 : i32, i32
  }
}

</mosaic_0001>

<llo_original>
// kernel: tpu_custom_call.1
$region0: #{tpu_custom_call.1}
  #allocation0 [shape = 'u32[]', space=smem, size = 0x4, offset = 0x4, fixed_abs, tag = 'smem constant byte address 0x4 - core index']
  #allocation1 [shape = 'u32[72,128]{1,0:T(1,128)}', space=vmem, size = 0x9000, scoped, tag = 'internal scratch']
  %s0 = inlined_call_operand.hbm [shape: f32[2,8,32], index: 0, kind: input, shape index: {}]
  %s1 = inlined_call_operand.hbm [shape: f32[1,1,32], index: 1, kind: input, shape index: {}]
  %s2 = inlined_call_operand.hbm [shape: f32[2,1,8], index: 2, kind: input, shape index: {}]
  %s3 = inlined_call_operand.hbm [shape: f32[2,32], index: 3, kind: output, shape index: {}]
  %s4 = sld [smem:[#allocation0]]
  $region34: #{tpu_custom_call.1} parent=0
    _
  %s6 = ssub.s32 1, %s4
  %s7 = scalar_select 0, %s6, %s4
  $region1: #{tpu_custom_call.1} parent=0
    #allocation2 [shape = 'u8[8192]{0}', space=vmem, size = 0x2000, scoped, tag = 'input window, operand 0, single buffered']
    #allocation3 [shape = 's32[1]{0}', space=sflag, size = 0x4, scoped, tag = 'scoped memory for tpu_custom_call.1']
    #allocation4 [shape = 's32[1]{0}', space=sflag, size = 0x4, scoped, tag = 'scoped memory for tpu_custom_call.1']
    #allocation5 [shape = 'u8[512]{0}', space=vmem, size = 0x400, scoped, tag = 'input window, operand 1, single buffered']
    #allocation6 [shape = 's32[1]{0}', space=sflag, size = 0x4, scoped, tag = 'scoped memory for tpu_custom_call.1']
    #allocation7 [shape = 'u8[1024]{0}', space=vmem, size = 0x400, scoped, tag = 'input window, operand 2, single buffered']
    #allocation8 [shape = 'u8[1024]{0}', space=vmem, size = 0x400, scoped, tag = 'output window, operand 0, single buffered']
    %8 = vsyncpa [#allocation3], 0
    %9 = vsyncpa [#allocation6], 0
    %10 = vsyncpa [#allocation4], 0
    // Predicated region
    $region2: #{tpu_custom_call.1} parent=1 // pred_check
      _
    $region3: #{tpu_custom_call.1} parent=1 // pred_check_branch
      %12 = sbr.rel (0) target = $region5
    $region4: #{tpu_custom_call.1} parent=1 // pred_region
      %14 = vsyncadd [#allocation3], 0
      %s15 = sshll.u32 %s0, 4
      %s16 = int_to_ptr.hbm [resolvable:$true] %s15
      %s17 = sshll.u32 [#allocation2], 4
      %s18 = int_to_ptr.vmem [resolvable:$true] %s17
      %23 = dma.hbm_to_vmem [thread:$0]  %s16, 256, %s18, [#allocation3], 128, 128, 8
    $region5: #{tpu_custom_call.1} parent=1 // pred_fallthru
      _
    // Predicated region
    $region6: #{tpu_custom_call.1} parent=1 // pred_check
      _
    $region7: #{tpu_custom_call.1} parent=1 // pred_check_branch
      %25 = sbr.rel (0) target = $region9
    $region8: #{tpu_custom_call.1} parent=1 // pred_region
      %27 = vsyncadd [#allocation6], 0
      %s29 = sshll.u32 %s1, 4
      %s30 = int_to_ptr.hbm [resolvable:$true] %s29
      %s31 = sshll.u32 [#allocation5], 4
      %s32 = int_to_ptr.vmem [resolvable:$true] %s31
      %34 = dma.hbm_to_vmem [thread:$0]  %s30, 16, %s32, [#allocation6]
    $region9: #{tpu_custom_call.1} parent=1 // pred_fallthru
      _
    // Predicated region
    $region10: #{tpu_custom_call.1} parent=1 // pred_check
      _
    $region11: #{tpu_custom_call.1} parent=1 // pred_check_branch
      %36 = sbr.rel (0) target = $region13
    $region12: #{tpu_custom_call.1} parent=1 // pred_region
      %38 = vsyncadd [#allocation6], 0
      %s39 = sshll.u32 %s2, 4
      %s40 = int_to_ptr.hbm [resolvable:$true] %s39
      %s41 = sshll.u32 [#allocation7], 4
      %s42 = int_to_ptr.vmem [resolvable:$true] %s41
      %47 = dma.hbm_to_vmem [thread:$0]  %s40, 32, %s42, [#allocation6], 16, 16, 1
    $region13: #{tpu_custom_call.1} parent=1 // pred_fallthru
      _
    // Predicated region
    $region14: #{tpu_custom_call.1} parent=1 // pred_check
      _
    $region15: #{tpu_custom_call.1} parent=1 // pred_check_branch
      %49 = sbr.rel (0) target = $region17
    $region16: #{tpu_custom_call.1} parent=1 // pred_region
      %51 = dma.done [#allocation3], 256
    $region17: #{tpu_custom_call.1} parent=1 // pred_fallthru
      _
    // Predicated region
    $region18: #{tpu_custom_call.1} parent=1 // pred_check
      _
    $region19: #{tpu_custom_call.1} parent=1 // pred_check_branch
      %53 = sbr.rel (0) target = $region21
    $region20: #{tpu_custom_call.1} parent=1 // pred_region
      %55 = dma.done [#allocation6], 16
    $region21: #{tpu_custom_call.1} parent=1 // pred_fallthru
      _
    // Predicated region
    $region22: #{tpu_custom_call.1} parent=1 // pred_check
      _
    $region23: #{tpu_custom_call.1} parent=1 // pred_check_branch
      %57 = sbr.rel (0) target = $region25
    $region24: #{tpu_custom_call.1} parent=1 // pred_region
      %59 = dma.done [#allocation6], 32
    $region25: #{tpu_custom_call.1} parent=1 // pred_fallthru
      _
    %v60 = vld [vmem:[#allocation2] sm:$0xff]
    %v61 = vld [vmem:[#allocation2 + $0x8] sm:$0xff]
    %v62 = vld [vmem:[#allocation5] sm:$0x1]
    %v63 = vld [vmem:[#allocation7] sm:$0x1]
    %v64 = vld [vmem:[#allocation7 + $0x1] sm:$0x1]
    %vm65 = vcmask 261120
    %v67 = vsel %vm65, %v62, 0
    %v70 = vsel %vm65, %v60, 0
    %72 = vmatpush.xpose.msra.mxu0 0.0
    %73 = vmatpush.xpose.msra.mxu0 0.0
    %74 = vmatpush.xpose.msra.mxu0 0.0
    %75 = vmatpush.xpose.msra.mxu0 0.0
    %76 = vmatpush.xpose.msra.mxu0 0.0
    %77 = vmatpush.xpose.msra.mxu0 0.0
    %78 = vmatpush.xpose.msra.mxu0 0.0
    %79 = vmatpush.xpose.msra.mxu0 0.0
    %80 = vmatpush.xpose.msra.mxu0 0.0
    %81 = vmatpush.xpose.msra.mxu0 0.0
    %82 = vmatpush.xpose.msra.mxu0 0.0
    %83 = vmatpush.xpose.msra.mxu0 0.0
    %84 = vmatpush.xpose.msra.mxu0 0.0
    %85 = vmatpush.xpose.msra.mxu0 0.0
    %86 = vmatpush.xpose.msra.mxu0 0.0
    %87 = vmatpush.xpose.msra.mxu0 %v70
    %88 = vmatmul.f32.gmra.mxu0 %v67
    %v89 = vpop.f32.mrf.mxu0
    %v90 = vadd.f32 %v63, %v89
    %91 = vdwg.mxu0
    %v93 = vsel %vm65, %v61, 0
    %95 = vmatpush.xpose.msra.mxu0 0.0
    %96 = vmatpush.xpose.msra.mxu0 0.0
    %97 = vmatpush.xpose.msra.mxu0 0.0
    %98 = vmatpush.xpose.msra.mxu0 0.0
    %99 = vmatpush.xpose.msra.mxu0 0.0
    %100 = vmatpush.xpose.msra.mxu0 0.0
    %101 = vmatpush.xpose.msra.mxu0 0.0
    %102 = vmatpush.xpose.msra.mxu0 0.0
    %103 = vmatpush.xpose.msra.mxu0 0.0
    %104 = vmatpush.xpose.msra.mxu0 0.0
    %105 = vmatpush.xpose.msra.mxu0 0.0
    %106 = vmatpush.xpose.msra.mxu0 0.0
    %107 = vmatpush.xpose.msra.mxu0 0.0
    %108 = vmatpush.xpose.msra.mxu0 0.0
    %109 = vmatpush.xpose.msra.mxu0 0.0
    %110 = vmatpush.xpose.msra.mxu0 %v93
    %111 = vmatmul.f32.gmra.mxu0 %v67
    %v112 = vpop.f32.mrf.mxu0
    %v113 = vadd.f32 %v64, %v112
    %114 = vdwg.mxu0
    %vm115 = vcmask 57344
    %v116 = vsel %vm115, %v90, -inf
    %117 = vmax.xlane.f32.xlu0 %v116
    %v118 = vpop.xlane.xlu0 %117
    %v119 = vsel %vm115, %v113, -inf
    %120 = vmax.xlane.f32.xlu0 %v119
    %v121 = vpop.xlane.xlu0 %120
    %v122 = vsub.f32 %v90, %v118
    %v123 = vsub.f32 %v113, %v121
    %v124 = vmul.f32 %v122, 1.442695
    %v125 = vpow.pop %v124
    %v126 = vmul.f32 %v123, 1.442695
    %v127 = vpow.pop %v126
    %v128 = vsel %vm115, %v125, 0.0
    %129 = vadd.xlane.f32.xlu0 %v128
    %v130 = vpop.xlane.xlu0 %129
    %v131 = vsel %vm115, %v127, 0.0
    %132 = vadd.xlane.f32.xlu0 %v131
    %v133 = vpop.xlane.xlu0 %132
    %vm134 = vcmask 64512
    %v136 = vsel %vm134, %v125, 0
    %138 = vmatpush.msra.mxu0 0.0
    %139 = vmatpush.msra.mxu0 0.0
    %140 = vmatpush.msra.mxu0 0.0
    %141 = vmatpush.msra.mxu0 0.0
    %142 = vmatpush.msra.mxu0 0.0
    %143 = vmatpush.msra.mxu0 0.0
    %144 = vmatpush.msra.mxu0 0.0
    %145 = vmatpush.msra.mxu0 0.0
    %146 = vmatpush.msra.mxu0 0.0
    %147 = vmatpush.msra.mxu0 0.0
    %148 = vmatpush.msra.mxu0 0.0
    %149 = vmatpush.msra.mxu0 0.0
    %150 = vmatpush.msra.mxu0 0.0
    %151 = vmatpush.msra.mxu0 0.0
    %152 = vmatpush.msra.mxu0 0.0
    %153 = vmatpush.msra.mxu0 %v60
    %154 = vmatmul.f32.gmra.mxu0 %v136
    %v155 = vpop.f32.mrf.mxu0
    %v156 = vadd.f32 0.0, %v155
    %157 = vdwg.mxu0
    %v159 = vsel %vm134, %v127, 0
    %161 = vmatpush.msra.mxu0 0.0
    %162 = vmatpush.msra.mxu0 0.0
    %163 = vmatpush.msra.mxu0 0.0
    %164 = vmatpush.msra.mxu0 0.0
    %165 = vmatpush.msra.mxu0 0.0
    %166 = vmatpush.msra.mxu0 0.0
    %167 = vmatpush.msra.mxu0 0.0
    %168 = vmatpush.msra.mxu0 0.0
    %169 = vmatpush.msra.mxu0 0.0
    %170 = vmatpush.msra.mxu0 0.0
    %171 = vmatpush.msra.mxu0 0.0
    %172 = vmatpush.msra.mxu0 0.0
    %173 = vmatpush.msra.mxu0 0.0
    %174 = vmatpush.msra.mxu0 0.0
    %175 = vmatpush.msra.mxu0 0.0
    %176 = vmatpush.msra.mxu0 %v61
    %177 = vmatmul.f32.gmra.mxu0 %v159
    %v178 = vpop.f32.mrf.mxu0
    %v179 = vadd.f32 0.0, %v178
    %180 = vdwg.mxu0
    %v181 = vrcp.pop %v130
    %v182 = vmul.f32 %v130, %v181
    %v183 = vsub.f32 1.0, %v182
    %v184 = vmul.f32 %v181, %v183
    %v185 = vadd.f32 %v181, %v184
    %vm186 = vweird.f32 %v130
    %vm187 = vweird.f32 %v181
    %vm188 = vmor %vm186, %vm187
    %v189 = vsel %vm188, %v181, %v185
    %v190 = vand.u32 2147483647, %v130
    %vm191 = vcmp.eq.f32.partialorder %v190, 8.507059e+37
    %v192 = vand.u32 %v130, 2147483648
    %v193 = vor.u32 1.1754944e-38, %v192
    %v194 = vsel %vm191, %v193, %v189
    %v195 = vrcp.pop %v133
    %v196 = vmul.f32 %v133, %v195
    %v197 = vsub.f32 1.0, %v196
    %v198 = vmul.f32 %v195, %v197
    %v199 = vadd.f32 %v195, %v198
    %vm200 = vweird.f32 %v133
    %vm201 = vweird.f32 %v195
    %vm202 = vmor %vm200, %vm201
    %v203 = vsel %vm202, %v195, %v199
    %v204 = vand.u32 2147483647, %v133
    %vm205 = vcmp.eq.f32.partialorder %v204, 8.507059e+37
    %v206 = vand.u32 %v133, 2147483648
    %v207 = vor.u32 1.1754944e-38, %v206
    %v208 = vsel %vm205, %v207, %v203
    %v209 = vmul.f32 %v156, %v194
    %v210 = vmul.f32 %v179, %v208
    %v213 = vrot.slane %v210, 7
    %vm214 = vcmask 1041409
    %v215 = vsel %vm214, %v213, %v209
    %vm217 = vcmask 254976
    %218 = vst.msk [vmem:[#allocation8] sm:$0x3] %vm217, %v215
    // Predicated region
    $region26: #{tpu_custom_call.1} parent=1 // pred_check
      _
    $region27: #{tpu_custom_call.1} parent=1 // pred_check_branch
      %220 = sbr.rel (0) target = $region29
    $region28: #{tpu_custom_call.1} parent=1 // pred_region
      %222 = vsyncadd [#allocation4], 0
      %s224 = sshll.u32 [#allocation8], 4
      %s225 = int_to_ptr.vmem [resolvable:$true] %s224
      %s226 = sshll.u32 %s3, 4
      %s227 = int_to_ptr.hbm [resolvable:$true] %s226
      %229 = dma.vmem_to_hbm [thread:$0]  %s225, 32, %s227, [#allocation4]
    $region29: #{tpu_custom_call.1} parent=1 // pred_fallthru
      _
    // Predicated region
    $region30: #{tpu_custom_call.1} parent=1 // pred_check
      _
    $region31: #{tpu_custom_call.1} parent=1 // pred_check_branch
      %231 = sbr.rel (0) target = $region33
    $region32: #{tpu_custom_call.1} parent=1 // pred_region
      %233 = dma.done [#allocation4], 32
    $region33: #{tpu_custom_call.1} parent=1 // pred_fallthru
      _
    %234 = vsyncpa [#allocation3], 1
    %235 = vsyncpa [#allocation6], 1
    %236 = vsyncpa [#allocation4], 1

</llo_original>
